<compile_context>
chip_gen: v7x
topology: tpu7x:2x2x1
jax: 0.10.0
libtpu: 0.0.40
codegen_flags: <defaults>
</compile_context>

<pallas_src>
import functools

import jax
import jax.numpy as jnp
from jax.experimental import pallas as pl
from jax.experimental.pallas import tpu as pltpu


# --------------------------------------------------------------------------- #
# Helpers
# --------------------------------------------------------------------------- #
def _round_up(x, m):
    return ((x + m - 1) // m) * m


def _vmem_capacity_bytes():
    """Per-core VMEM capacity; conservative fallback = 64 MiB (v7x)."""
    try:
        return int(pltpu.get_tpu_info().vmem_capacity_bytes)
    except Exception:
        return 64 * 1024 * 1024


def _resident_spec(shape):
    """Grid-invariant operand: constant index map, single-buffered in VMEM."""
    const_map = lambda i: (0, 0)
    try:
        return pl.BlockSpec(shape, const_map, pipeline_mode=pl.Buffered(1))
    except TypeError:  # older jax without the pipeline_mode kwarg
        return pl.BlockSpec(shape, const_map)


def _pick_tile(n, cap):
    """Largest multiple of 128 <= cap that divides n (n is a multiple of 128)."""
    best, t = 128, 128
    while t <= min(n, cap):
        if n % t == 0:
            best = t
        t += 128
    return best


# --------------------------------------------------------------------------- #
# Parameter preparation (hoisted out of the per-call path)
# --------------------------------------------------------------------------- #
def prepare_params(params, compute_dtype=jnp.bfloat16):
    """Pad every feature dim to a multiple of 128 and cast weights ONCE.

    Weights are stored (in_features, out_features); biases (1, out_features).
    Zero padding is mathematically exact (padded bias = 0 keeps padded columns
    at 0 through ReLU); biases stay f32 since they are added to the f32 acc.
    """
    n_layers = 4
    dims = [params["w1"].shape[0]] + [params[f"w{i + 1}"].shape[1] for i in range(n_layers)]
    pdims = [_round_up(d, 128) for d in dims]

    def pad2(a, rows, cols, dtype):
        return jnp.pad(a, ((0, rows - a.shape[0]), (0, cols - a.shape[1]))).astype(dtype)

    ws, bs = [], []
    for i in range(n_layers):
        ws.append(pad2(params[f"w{i + 1}"], pdims[i], pdims[i + 1], compute_dtype))
        bs.append(pad2(params[f"b{i + 1}"], 1, pdims[i + 1], jnp.float32))
    return dict(ws=tuple(ws), bs=tuple(bs), dims=tuple(dims), pdims=tuple(pdims),
                compute_dtype=jnp.dtype(compute_dtype))


# --------------------------------------------------------------------------- #
# Fused path: all weights VMEM-resident, one batch-tiled grid
# --------------------------------------------------------------------------- #
def _mlp_kernel(x_ref, w1_ref, b1_ref, w2_ref, b2_ref,
                w3_ref, b3_ref, w4_ref, b4_ref, o_ref):
    """One batch tile of the 4-layer MLP. f32 accumulation on the MXU."""
    cdt = w1_ref.dtype  # matmul operand dtype (f32 or bf16)

    h = x_ref[...]
    h = jnp.dot(h, w1_ref[...], preferred_element_type=jnp.float32) + b1_ref[...]
    h = jnp.maximum(h, 0.0).astype(cdt)

    h = jnp.dot(h, w2_ref[...], preferred_element_type=jnp.float32) + b2_ref[...]
    h = jnp.maximum(h, 0.0).astype(cdt)

    h = jnp.dot(h, w3_ref[...], preferred_element_type=jnp.float32) + b3_ref[...]
    h = jnp.maximum(h, 0.0).astype(cdt)

    z = jnp.dot(h, w4_ref[...], preferred_element_type=jnp.float32) + b4_ref[...]
    o_ref[...] = jax.nn.sigmoid(z).astype(o_ref.dtype)


def _fused_forward(x_p, prep, b_pad, tb, vmem_cap):
    ws, bs, pdims = prep["ws"], prep["bs"], prep["pdims"]
    cdt = prep["compute_dtype"]
    csize = cdt.itemsize

    row_map = lambda i: (i, 0)
    in_specs = [pl.BlockSpec((tb, pdims[0]), row_map)]
    operands = [x_p]
    for i in range(4):
        in_specs.append(_resident_spec((pdims[i], pdims[i + 1])))
        in_specs.append(_resident_spec((1, pdims[i + 1])))
        operands.append(ws[i])
        operands.append(bs[i])

    weight_bytes = sum(int(w.size) * w.dtype.itemsize for w in ws)
    bias_bytes = sum(8 * p * 4 for p in pdims[1:])  # (1, N) occupies 8 sublanes
    step_bytes = tb * (2 * pdims[0] * csize + 2 * pdims[4] * 4 + 3 * max(pdims[1:4]) * 4)
    vmem_limit = int(min(max(weight_bytes + bias_bytes + step_bytes + (6 << 20), 32 << 20),
                         0.92 * vmem_cap))

    flops = 2 * b_pad * sum(pdims[i] * pdims[i + 1] for i in range(4))
    bytes_accessed = int(x_p.size * x_p.dtype.itemsize + weight_bytes
                         + sum(int(b.size) * 4 for b in bs) + b_pad * pdims[4] * 4)

    return pl.pallas_call(
        _mlp_kernel,
        out_shape=jax.ShapeDtypeStruct((b_pad, pdims[4]), jnp.float32),
        grid=(b_pad // tb,),
        in_specs=in_specs,
        out_specs=pl.BlockSpec((tb, pdims[4]), row_map),
        compiler_params=pltpu.CompilerParams(
            dimension_semantics=("parallel",),
            vmem_limit_bytes=vmem_limit,
        ),
        cost_estimate=pl.CostEstimate(
            flops=flops,
            transcendentals=b_pad * pdims[4],
            bytes_accessed=bytes_accessed,
        ),
    )(*operands)


# --------------------------------------------------------------------------- #
# Fallback path: per-layer K-tiled matmul (weights too large to stay resident)
# --------------------------------------------------------------------------- #
def _linear_kernel(x_ref, w_ref, b_ref, o_ref, acc_ref, *, act):
    @pl.when(pl.program_id(2) == 0)
    def _():
        acc_ref[...] = jnp.zeros_like(acc_ref)

    acc_ref[...] += jnp.dot(x_ref[...], w_ref[...], preferred_element_type=jnp.float32)

    @pl.when(pl.program_id(2) == pl.num_programs(2) - 1)
    def _():
        z = acc_ref[...] + b_ref[...]
        z = jnp.maximum(z, 0.0) if act == "relu" else jax.nn.sigmoid(z)
        o_ref[...] = z.astype(o_ref.dtype)


def _linear_layer(x, w, b, *, act, out_dtype, tm, vmem_cap, cap_tile=512):
    M, K = x.shape
    N = w.shape[1]
    tm = min(tm, M)
    tn = _pick_tile(N, cap_tile)
    tk = _pick_tile(K, cap_tile)

    xs, wsz, osz = x.dtype.itemsize, w.dtype.itemsize, jnp.dtype(out_dtype).itemsize
    needed = (2 * (tm * tk * xs + tk * tn * wsz + 8 * tn * 4 + tm * tn * osz)
              + tm * tn * 4 + (4 << 20))
    vmem_limit = int(min(max(needed, 32 << 20), 0.92 * vmem_cap))

    return pl.pallas_call(
        functools.partial(_linear_kernel, act=act),
        out_shape=jax.ShapeDtypeStruct((M, N), out_dtype),
        grid=(M // tm, N // tn, K // tk),
        in_specs=[pl.BlockSpec((tm, tk), lambda i, j, k: (i, k)),
                  pl.BlockSpec((tk, tn), lambda i, j, k: (k, j)),
                  pl.BlockSpec((1, tn), lambda i, j, k: (0, j))],
        out_specs=pl.BlockSpec((tm, tn), lambda i, j, k: (i, j)),
        scratch_shapes=[pltpu.VMEM((tm, tn), jnp.float32)],
        compiler_params=pltpu.CompilerParams(
            dimension_semantics=("parallel", "parallel", "arbitrary"),
            vmem_limit_bytes=vmem_limit,
        ),
    )(x, w, b)


def _layerwise_forward(x_p, prep, b_pad, tb, vmem_cap):
    ws, bs = prep["ws"], prep["bs"]
    cdt = prep["compute_dtype"]
    acts = ("relu", "relu", "relu", "sigmoid")
    out_dts = (cdt, cdt, cdt, jnp.float32)
    h = x_p
    for i in range(4):
        h = _linear_layer(h, ws[i], bs[i], act=acts[i], out_dtype=out_dts[i],
                          tm=tb, vmem_cap=vmem_cap)
    return h


# --------------------------------------------------------------------------- #
# Public forward
# --------------------------------------------------------------------------- #
def neural_network_controlled_forward(x, prepared, *, block_b=512, force_layerwise=False):
    """x: (B, ...) float; prepared: output of prepare_params()."""
    batch = x.shape[0]
    x_flat = x.reshape(batch, -1)  # nn.Flatten: row-major over trailing dims
    dims, pdims = prepared["dims"], prepared["pdims"]
    cdt = prepared["compute_dtype"]
    assert x_flat.shape[1] == dims[0], "flattened input width must equal n_in"

    block_b = _round_up(block_b, 8)
    csize = cdt.itemsize
    vmem_cap = _vmem_capacity_bytes()

    # Capacity gate: can (single-buffered) weights + pipeline buffers + live
    # intermediates stay resident in VMEM? If not, use the K-tiled layer path.
    weight_bytes = sum(int(w.size) * w.dtype.itemsize for w in prepared["ws"])
    bias_bytes = sum(8 * p * 4 for p in pdims[1:])
    per_row_bytes = 2 * pdims[0] * csize + 2 * pdims[4] * 4 + 3 * max(pdims[1:4]) * 4
    act_budget = int(0.75 * vmem_cap) - weight_bytes - bias_bytes
    use_fused = (not force_layerwise) and act_budget >= 8 * per_row_bytes

    # Batch tile: as large as VMEM allows (amortize ~0.35us/step), but at least
    # 2 grid steps when batch permits (megacore on v7x), tight remainder.
    if use_fused:
        tb_vmem_max = max(8, (act_budget // max(per_row_bytes, 1)) // 8 * 8)
    else:
        tb_vmem_max = block_b
    tb_cap = max(8, min(block_b, tb_vmem_max))
    n_tiles = pl.cdiv(batch, tb_cap)
    if n_tiles == 1 and batch > 8:
        n_tiles = 2
    tb = min(tb_cap, _round_up(pl.cdiv(batch, n_tiles), 8))
    b_pad = _round_up(batch, tb)

    # Per-call activation pad/cast only (params were padded once up front).
    x_p = jnp.pad(x_flat, ((0, b_pad - batch), (0, pdims[0] - dims[0]))).astype(cdt)

    if use_fused:
        out = _fused_forward(x_p, prepared, b_pad, tb, vmem_cap)
    else:
        out = _layerwise_forward(x_p, prepared, b_pad, tb, vmem_cap)

    return out[:batch, :dims[4]]


# --------------------------------------------------------------------------- #
# Init + reference
# --------------------------------------------------------------------------- #
def init_params(key, n_in, n_out, multipliers=(6, 20, 16)):
    """torch.nn.Linear default init (U[-1/sqrt(fan_in), 1/sqrt(fan_in)]).

    Weights stored transposed: (in_features, out_features); biases (1, out).
    """
    dims = [n_in] + [int(m * n_in) for m in multipliers] + [n_out]
    params = {}
    for i in range(len(dims) - 1):
        fan_in, fan_out = dims[i], dims[i + 1]
        key, kw, kb = jax.random.split(key, 3)
        bound = 1.0 / jnp.sqrt(jnp.float32(fan_in))
        params[f"w{i + 1}"] = jax.random.uniform(
            kw, (fan_in, fan_out), jnp.float32, -bound, bound)
        params[f"b{i + 1}"] = jax.random.uniform(
            kb, (1, fan_out), jnp.float32, -bound, bound)
    return params


def _reference_forward(x, params):
    h = x.reshape(x.shape[0], -1)
    h = jnp.maximum(h @ params["w1"] + params["b1"], 0.0)
    h = jnp.maximum(h @ params["w2"] + params["b2"], 0.0)
    h = jnp.maximum(h @ params["w3"] + params["b3"], 0.0)
    return jax.nn.sigmoid(h @ params["w4"] + params["b4"])


if __name__ == "__main__":
    # input (B, C=1, H=4, W=4) -> n_in = 16, n_out = 8
    n_in, n_out = 16, 8
    key = jax.random.PRNGKey(0)
    key, kx1, kx2 = jax.random.split(key, 3)
    x_small = jax.random.normal(kx1, (2, 1, 4, 4), jnp.float32)    # single-step grid
    x_mid = jax.random.normal(kx2, (20, 1, 4, 4), jnp.float32)     # 2-step batch grid

    params = init_params(key, n_in, n_out, multipliers=(6, 20, 16))
    ref_small = _reference_forward(x_small, params)
    ref_mid = _reference_forward(x_mid, params)

    # Fused path, f32 MXU operands: tight match vs the reference.
    prep_f32 = prepare_params(params, compute_dtype=jnp.float32)
    out = jax.block_until_ready(neural_network_controlled_forward(x_small, prep_f32))
    assert out.shape == (2, n_out)
    assert jnp.allclose(out, ref_small, atol=2e-5, rtol=1e-4), "f32 fused mismatch"

    # Fused path, default bf16 operands (f32 accumulation), multi-step batch grid.
    prep_bf16 = prepare_params(params)  # bf16 default
    out = jax.block_until_ready(neural_network_controlled_forward(x_mid, prep_bf16))
    assert out.shape == (20, n_out)
    assert jnp.allclose(out, ref_mid, atol=5e-2, rtol=5e-2), "bf16 fused mismatch"

    # K-tiled per-layer fallback path (used when weights don't fit in VMEM).
    out = jax.block_until_ready(
        neural_network_controlled_forward(x_mid, prep_f32, force_layerwise=True))
    assert out.shape == (20, n_out)
    assert jnp.allclose(out, ref_mid, atol=2e-5, rtol=1e-4), "layerwise mismatch"

    print("KERNEL_OK")
</pallas_src>

<mosaic_0001>
module attributes {stable_mosaic.version = 11 : i64} {
  func.func @_mlp_kernel(%arg0: i32, %arg1: memref<8x128xf32, #tpu.memory_space<vmem>>, %arg2: memref<128x128xf32, #tpu.memory_space<vmem>>, %arg3: memref<1x128xf32, #tpu.memory_space<vmem>>, %arg4: memref<128x384xf32, #tpu.memory_space<vmem>>, %arg5: memref<1x384xf32, #tpu.memory_space<vmem>>, %arg6: memref<384x256xf32, #tpu.memory_space<vmem>>, %arg7: memref<1x256xf32, #tpu.memory_space<vmem>>, %arg8: memref<256x128xf32, #tpu.memory_space<vmem>>, %arg9: memref<1x128xf32, #tpu.memory_space<vmem>>, %arg10: memref<8x128xf32, #tpu.memory_space<vmem>>) attributes {dimension_semantics = [#tpu.dimension_semantics<parallel>], iteration_bounds = array<i64: 1>, scalar_prefetch = 0 : i64, scratch_operands = 0 : i64, tpu.core_type = #tpu.core_type<tc>, window_params = [{transform_indices = @transform_0, window_bounds = array<i64: 8, 128>}, {pipeline_mode = #tpu.pipeline_mode<synchronous>, transform_indices = @transform_1, window_bounds = array<i64: 128, 128>}, {pipeline_mode = #tpu.pipeline_mode<synchronous>, transform_indices = @transform_2, window_bounds = array<i64: 1, 128>}, {pipeline_mode = #tpu.pipeline_mode<synchronous>, transform_indices = @transform_3, window_bounds = array<i64: 128, 384>}, {pipeline_mode = #tpu.pipeline_mode<synchronous>, transform_indices = @transform_4, window_bounds = array<i64: 1, 384>}, {pipeline_mode = #tpu.pipeline_mode<synchronous>, transform_indices = @transform_5, window_bounds = array<i64: 384, 256>}, {pipeline_mode = #tpu.pipeline_mode<synchronous>, transform_indices = @transform_6, window_bounds = array<i64: 1, 256>}, {pipeline_mode = #tpu.pipeline_mode<synchronous>, transform_indices = @transform_7, window_bounds = array<i64: 256, 128>}, {pipeline_mode = #tpu.pipeline_mode<synchronous>, transform_indices = @transform_8, window_bounds = array<i64: 1, 128>}, {transform_indices = @transform_9, window_bounds = array<i64: 8, 128>}]} {
    %c0 = arith.constant 0 : index
    %c0_0 = arith.constant 0 : index
    %0 = vector.load %arg1[%c0, %c0_0] : memref<8x128xf32, #tpu.memory_space<vmem>>, vector<8x128xf32>
    %c0_1 = arith.constant 0 : index
    %c0_2 = arith.constant 0 : index
    %1 = vector.load %arg2[%c0_1, %c0_2] : memref<128x128xf32, #tpu.memory_space<vmem>>, vector<128x128xf32>
    %cst = arith.constant dense<0.000000e+00> : vector<8x128xf32>
    %2 = tpu.matmul %0, %1, %cst {dimension_numbers = #tpu.dot_dimension_numbers<[1], [0], [0], [1], [0, 0, 1, 1], [], []>} : vector<8x128xf32>, vector<128x128xf32>, vector<8x128xf32> -> vector<8x128xf32>
    %c0_3 = arith.constant 0 : index
    %c0_4 = arith.constant 0 : index
    %3 = vector.load %arg3[%c0_3, %c0_4] : memref<1x128xf32, #tpu.memory_space<vmem>>, vector<1x128xf32>
    %4 = vector.broadcast %3 : vector<1x128xf32> to vector<8x128xf32>
    %5 = arith.addf %2, %4 : vector<8x128xf32>
    %cst_5 = arith.constant 0.000000e+00 : f32
    %6 = vector.broadcast %cst_5 : f32 to vector<8x128xf32>
    %7 = arith.maximumf %5, %6 : vector<8x128xf32>
    %c0_6 = arith.constant 0 : index
    %c0_7 = arith.constant 0 : index
    %8 = vector.load %arg4[%c0_6, %c0_7] : memref<128x384xf32, #tpu.memory_space<vmem>>, vector<128x384xf32>
    %cst_8 = arith.constant dense<0.000000e+00> : vector<8x384xf32>
    %9 = tpu.matmul %7, %8, %cst_8 {dimension_numbers = #tpu.dot_dimension_numbers<[1], [0], [0], [1], [0, 0, 1, 1], [], []>} : vector<8x128xf32>, vector<128x384xf32>, vector<8x384xf32> -> vector<8x384xf32>
    %c0_9 = arith.constant 0 : index
    %c0_10 = arith.constant 0 : index
    %10 = vector.load %arg5[%c0_9, %c0_10] : memref<1x384xf32, #tpu.memory_space<vmem>>, vector<1x384xf32>
    %11 = vector.broadcast %10 : vector<1x384xf32> to vector<8x384xf32>
    %12 = arith.addf %9, %11 : vector<8x384xf32>
    %cst_11 = arith.constant 0.000000e+00 : f32
    %13 = vector.broadcast %cst_11 : f32 to vector<8x384xf32>
    %14 = arith.maximumf %12, %13 : vector<8x384xf32>
    %c0_12 = arith.constant 0 : index
    %c0_13 = arith.constant 0 : index
    %15 = vector.load %arg6[%c0_12, %c0_13] : memref<384x256xf32, #tpu.memory_space<vmem>>, vector<384x256xf32>
    %cst_14 = arith.constant dense<0.000000e+00> : vector<8x256xf32>
    %16 = tpu.matmul %14, %15, %cst_14 {dimension_numbers = #tpu.dot_dimension_numbers<[1], [0], [0], [1], [0, 0, 1, 1], [], []>} : vector<8x384xf32>, vector<384x256xf32>, vector<8x256xf32> -> vector<8x256xf32>
    %c0_15 = arith.constant 0 : index
    %c0_16 = arith.constant 0 : index
    %17 = vector.load %arg7[%c0_15, %c0_16] : memref<1x256xf32, #tpu.memory_space<vmem>>, vector<1x256xf32>
    %18 = vector.broadcast %17 : vector<1x256xf32> to vector<8x256xf32>
    %19 = arith.addf %16, %18 : vector<8x256xf32>
    %cst_17 = arith.constant 0.000000e+00 : f32
    %20 = vector.broadcast %cst_17 : f32 to vector<8x256xf32>
    %21 = arith.maximumf %19, %20 : vector<8x256xf32>
    %c0_18 = arith.constant 0 : index
    %c0_19 = arith.constant 0 : index
    %22 = vector.load %arg8[%c0_18, %c0_19] : memref<256x128xf32, #tpu.memory_space<vmem>>, vector<256x128xf32>
    %cst_20 = arith.constant dense<0.000000e+00> : vector<8x128xf32>
    %23 = tpu.matmul %21, %22, %cst_20 {dimension_numbers = #tpu.dot_dimension_numbers<[1], [0], [0], [1], [0, 0, 1, 1], [], []>} : vector<8x256xf32>, vector<256x128xf32>, vector<8x128xf32> -> vector<8x128xf32>
    %c0_21 = arith.constant 0 : index
    %c0_22 = arith.constant 0 : index
    %24 = vector.load %arg9[%c0_21, %c0_22] : memref<1x128xf32, #tpu.memory_space<vmem>>, vector<1x128xf32>
    %25 = vector.broadcast %24 : vector<1x128xf32> to vector<8x128xf32>
    %26 = arith.addf %23, %25 : vector<8x128xf32>
    %27 = arith.negf %26 : vector<8x128xf32>
    %28 = math.exp %27 : vector<8x128xf32>
    %cst_23 = arith.constant 1.000000e+00 : f32
    %29 = vector.broadcast %cst_23 : f32 to vector<8x128xf32>
    %30 = arith.addf %29, %28 : vector<8x128xf32>
    %31 = arith.divf %29, %30 : vector<8x128xf32>
    %c0_24 = arith.constant 0 : index
    %c0_25 = arith.constant 0 : index
    %32 = vector.load %arg10[%c0_24, %c0_25] : memref<8x128xf32, #tpu.memory_space<vmem>>, vector<8x128xf32>
    tpu.vector_store %arg10[%c0_24, %c0_25], %31 {strides = array<i32>} : memref<8x128xf32, #tpu.memory_space<vmem>>, vector<8x128xf32>,
    return
  }
  func.func @transform_0(%arg0: i32) -> (i32, i32) {
    %c0_i32 = arith.constant 0 : i32
    %c0_i32_0 = arith.constant 0 : i32
    return %arg0, %c0_i32 : i32, i32
  }
  func.func @transform_1(%arg0: i32) -> (i32, i32) {
    %c0_i32 = arith.constant 0 : i32
    %c0_i32_0 = arith.constant 0 : i32
    %c0_i32_1 = arith.constant 0 : i32
    return %c0_i32, %c0_i32_0 : i32, i32
  }
  func.func @transform_2(%arg0: i32) -> (i32, i32) {
    %c0_i32 = arith.constant 0 : i32
    %c0_i32_0 = arith.constant 0 : i32
    %c0_i32_1 = arith.constant 0 : i32
    return %c0_i32, %c0_i32_0 : i32, i32
  }
  func.func @transform_3(%arg0: i32) -> (i32, i32) {
    %c0_i32 = arith.constant 0 : i32
    %c0_i32_0 = arith.constant 0 : i32
    %c0_i32_1 = arith.constant 0 : i32
    return %c0_i32, %c0_i32_0 : i32, i32
  }
  func.func @transform_4(%arg0: i32) -> (i32, i32) {
    %c0_i32 = arith.constant 0 : i32
    %c0_i32_0 = arith.constant 0 : i32
    %c0_i32_1 = arith.constant 0 : i32
    return %c0_i32, %c0_i32_0 : i32, i32
  }
  func.func @transform_5(%arg0: i32) -> (i32, i32) {
    %c0_i32 = arith.constant 0 : i32
    %c0_i32_0 = arith.constant 0 : i32
    %c0_i32_1 = arith.constant 0 : i32
    return %c0_i32, %c0_i32_0 : i32, i32
  }
  func.func @transform_6(%arg0: i32) -> (i32, i32) {
    %c0_i32 = arith.constant 0 : i32
    %c0_i32_0 = arith.constant 0 : i32
    %c0_i32_1 = arith.constant 0 : i32
    return %c0_i32, %c0_i32_0 : i32, i32
  }
  func.func @transform_7(%arg0: i32) -> (i32, i32) {
    %c0_i32 = arith.constant 0 : i32
    %c0_i32_0 = arith.constant 0 : i32
    %c0_i32_1 = arith.constant 0 : i32
    return %c0_i32, %c0_i32_0 : i32, i32
  }
  func.func @transform_8(%arg0: i32) -> (i32, i32) {
    %c0_i32 = arith.constant 0 : i32
    %c0_i32_0 = arith.constant 0 : i32
    %c0_i32_1 = arith.constant 0 : i32
    return %c0_i32, %c0_i32_0 : i32, i32
  }
  func.func @transform_9(%arg0: i32) -> (i32, i32) {
    %c0_i32 = arith.constant 0 : i32
    %c0_i32_0 = arith.constant 0 : i32
    return %arg0, %c0_i32 : i32, i32
  }
}

</mosaic_0001>

<llo_original>
// kernel: tpu_custom_call.1
$region0: #{tpu_custom_call.1}
  #allocation0 [shape = 'u32[]', space=smem, size = 0x4, offset = 0x4, fixed_abs, tag = 'smem constant byte address 0x4 - core index']
  #allocation1 [shape = 'u32[144,128]{1,0:T(1,128)}', space=vmem, size = 0x12000, scoped, tag = 'internal scratch']
  %s0 = inlined_call_operand.hbm [shape: f32[8,128], index: 0, kind: input, shape index: {}]
  %s1 = inlined_call_operand.hbm [shape: f32[128,128], index: 1, kind: input, shape index: {}]
  %s2 = inlined_call_operand.vmem [shape: f32[1,128], index: 2, kind: input, shape index: {}]
  %s3 = inlined_call_operand.hbm [shape: f32[128,384], index: 3, kind: input, shape index: {}]
  %s4 = inlined_call_operand.vmem [shape: f32[1,384], index: 4, kind: input, shape index: {}]
  %s5 = inlined_call_operand.hbm [shape: f32[384,256], index: 5, kind: input, shape index: {}]
  %s6 = inlined_call_operand.vmem [shape: f32[1,256], index: 6, kind: input, shape index: {}]
  %s7 = inlined_call_operand.hbm [shape: f32[256,128], index: 7, kind: input, shape index: {}]
  %s8 = inlined_call_operand.vmem [shape: f32[1,128], index: 8, kind: input, shape index: {}]
  %s9 = inlined_call_operand.hbm [shape: f32[8,128], index: 9, kind: output, shape index: {}]
  %s10 = sld [smem:[#allocation0]]
  $region66: #{tpu_custom_call.1} parent=0
    _
  %s12 = ssub.s32 1, %s10
  %s13 = scalar_select 0, %s12, %s10
  $region1: #{tpu_custom_call.1} parent=0
    #allocation2 [shape = 'u8[4096]{0}', space=vmem, size = 0x1000, scoped, tag = 'input window, operand 0, single buffered']
    #allocation3 [shape = 's32[1]{0}', space=sflag, size = 0x4, scoped, tag = 'scoped memory for tpu_custom_call.1']
    #allocation4 [shape = 's32[1]{0}', space=sflag, size = 0x4, scoped, tag = 'scoped memory for tpu_custom_call.1']
    #allocation5 [shape = 'u8[65536]{0}', space=vmem, size = 0x10000, scoped, tag = 'input window, operand 1, single buffered']
    #allocation6 [shape = 's32[1]{0}', space=sflag, size = 0x4, scoped, tag = 'scoped memory for tpu_custom_call.1']
    #allocation7 [shape = 'u8[196608]{0}', space=vmem, size = 0x30000, scoped, tag = 'input window, operand 3, single buffered']
    #allocation8 [shape = 'u8[393216]{0}', space=vmem, size = 0x60000, scoped, tag = 'input window, operand 5, single buffered']
    #allocation9 [shape = 's32[1]{0}', space=sflag, size = 0x4, scoped, tag = 'scoped memory for tpu_custom_call.1']
    #allocation10 [shape = 'u8[131072]{0}', space=vmem, size = 0x20000, scoped, tag = 'input window, operand 7, single buffered']
    #allocation11 [shape = 'u8[4096]{0}', space=vmem, size = 0x1000, scoped, tag = 'output window, operand 0, single buffered']
    %14 = vsyncpa [#allocation3], 0
    %15 = vsyncpa [#allocation6], 0
    %16 = vsyncpa [#allocation9], 0
    %17 = vsyncpa [#allocation4], 0
    // Predicated region
    $region2: #{tpu_custom_call.1} parent=1 // pred_check
      _
    $region3: #{tpu_custom_call.1} parent=1 // pred_check_branch
      %19 = sbr.rel (0) target = $region5
    $region4: #{tpu_custom_call.1} parent=1 // pred_region
      %s21 = ssub.s32 128, 128
      %22 = vsyncadd [#allocation3], %s21
      %s24 = sshll.u32 [#allocation2], 4
      %s25 = int_to_ptr.vmem [resolvable:$true] %s24
      %27 = dma.hbm_to_vmem [thread:$0]  %s0, 128, %s25, [#allocation3]
    $region5: #{tpu_custom_call.1} parent=1 // pred_fallthru
      _
    // Predicated region
    $region6: #{tpu_custom_call.1} parent=1 // pred_check
      _
    $region7: #{tpu_custom_call.1} parent=1 // pred_check_branch
      %29 = sbr.rel (0) target = $region9
    $region8: #{tpu_custom_call.1} parent=1 // pred_region
      %s31 = ssub.s32 2048, 2048
      %32 = vsyncadd [#allocation6], %s31
      %s33 = sshll.u32 [#allocation5], 4
      %s34 = int_to_ptr.vmem [resolvable:$true] %s33
      %39 = dma.hbm_to_vmem [thread:$0]  %s1, 2048, %s34, [#allocation6], 128, 128, 8
    $region9: #{tpu_custom_call.1} parent=1 // pred_fallthru
      _
    // Predicated region
    $region10: #{tpu_custom_call.1} parent=1 // pred_check
      _
    $region11: #{tpu_custom_call.1} parent=1 // pred_check_branch
      %41 = sbr.rel (0) target = $region13
    $region12: #{tpu_custom_call.1} parent=1 // pred_region
      _
    $region13: #{tpu_custom_call.1} parent=1 // pred_fallthru
      _
    // Predicated region
    $region14: #{tpu_custom_call.1} parent=1 // pred_check
      _
    $region15: #{tpu_custom_call.1} parent=1 // pred_check_branch
      %43 = sbr.rel (0) target = $region17
    $region16: #{tpu_custom_call.1} parent=1 // pred_region
      %s45 = ssub.s32 6144, 6144
      %46 = vsyncadd [#allocation6], %s45
      %s47 = sshll.u32 [#allocation7], 4
      %s48 = int_to_ptr.vmem [resolvable:$true] %s47
      %53 = dma.hbm_to_vmem [thread:$0]  %s3, 6144, %s48, [#allocation6], 384, 384, 24
    $region17: #{tpu_custom_call.1} parent=1 // pred_fallthru
      _
    // Predicated region
    $region18: #{tpu_custom_call.1} parent=1 // pred_check
      _
    $region19: #{tpu_custom_call.1} parent=1 // pred_check_branch
      %55 = sbr.rel (0) target = $region21
    $region20: #{tpu_custom_call.1} parent=1 // pred_region
      _
    $region21: #{tpu_custom_call.1} parent=1 // pred_fallthru
      _
    // Predicated region
    $region22: #{tpu_custom_call.1} parent=1 // pred_check
      _
    $region23: #{tpu_custom_call.1} parent=1 // pred_check_branch
      %57 = sbr.rel (0) target = $region25
    $region24: #{tpu_custom_call.1} parent=1 // pred_region
      %s59 = ssub.s32 12288, 12288
      %60 = vsyncadd [#allocation9], %s59
      %s61 = sshll.u32 [#allocation8], 4
      %s62 = int_to_ptr.vmem [resolvable:$true] %s61
      %67 = dma.hbm_to_vmem [thread:$0]  %s5, 12288, %s62, [#allocation9], 256, 256, 16
    $region25: #{tpu_custom_call.1} parent=1 // pred_fallthru
      _
    // Predicated region
    $region26: #{tpu_custom_call.1} parent=1 // pred_check
      _
    $region27: #{tpu_custom_call.1} parent=1 // pred_check_branch
      %69 = sbr.rel (0) target = $region29
    $region28: #{tpu_custom_call.1} parent=1 // pred_region
      _
    $region29: #{tpu_custom_call.1} parent=1 // pred_fallthru
      _
    // Predicated region
    $region30: #{tpu_custom_call.1} parent=1 // pred_check
      _
    $region31: #{tpu_custom_call.1} parent=1 // pred_check_branch
      %71 = sbr.rel (0) target = $region33
    $region32: #{tpu_custom_call.1} parent=1 // pred_region
      %s73 = ssub.s32 4096, 4096
      %74 = vsyncadd [#allocation9], %s73
      %s75 = sshll.u32 [#allocation10], 4
      %s76 = int_to_ptr.vmem [resolvable:$true] %s75
      %81 = dma.hbm_to_vmem [thread:$0]  %s7, 4096, %s76, [#allocation9], 128, 128, 8
    $region33: #{tpu_custom_call.1} parent=1 // pred_fallthru
      _
    // Predicated region
    $region34: #{tpu_custom_call.1} parent=1 // pred_check
      _
    $region35: #{tpu_custom_call.1} parent=1 // pred_check_branch
      %83 = sbr.rel (0) target = $region37
    $region36: #{tpu_custom_call.1} parent=1 // pred_region
      _
    $region37: #{tpu_custom_call.1} parent=1 // pred_fallthru
      _
    // Predicated region
    $region38: #{tpu_custom_call.1} parent=1 // pred_check
      _
    $region39: #{tpu_custom_call.1} parent=1 // pred_check_branch
      %85 = sbr.rel (0) target = $region41
    $region40: #{tpu_custom_call.1} parent=1 // pred_region
      %86 = dma.done [#allocation3], 128
    $region41: #{tpu_custom_call.1} parent=1 // pred_fallthru
      _
    // Predicated region
    $region42: #{tpu_custom_call.1} parent=1 // pred_check
      _
    $region43: #{tpu_custom_call.1} parent=1 // pred_check_branch
      %88 = sbr.rel (0) target = $region45
    $region44: #{tpu_custom_call.1} parent=1 // pred_region
      %89 = dma.done [#allocation6], 2048
    $region45: #{tpu_custom_call.1} parent=1 // pred_fallthru
      _
    // Predicated region
    $region46: #{tpu_custom_call.1} parent=1 // pred_check
      _
    $region47: #{tpu_custom_call.1} parent=1 // pred_check_branch
      %91 = sbr.rel (0) target = $region49
    $region48: #{tpu_custom_call.1} parent=1 // pred_region
      %92 = dma.done [#allocation6], 6144
    $region49: #{tpu_custom_call.1} parent=1 // pred_fallthru
      _
    // Predicated region
    $region50: #{tpu_custom_call.1} parent=1 // pred_check
      _
    $region51: #{tpu_custom_call.1} parent=1 // pred_check_branch
      %94 = sbr.rel (0) target = $region53
    $region52: #{tpu_custom_call.1} parent=1 // pred_region
      %95 = dma.done [#allocation9], 12288
    $region53: #{tpu_custom_call.1} parent=1 // pred_fallthru
      _
    // Predicated region
    $region54: #{tpu_custom_call.1} parent=1 // pred_check
      _
    $region55: #{tpu_custom_call.1} parent=1 // pred_check_branch
      %97 = sbr.rel (0) target = $region57
    $region56: #{tpu_custom_call.1} parent=1 // pred_region
      %98 = dma.done [#allocation9], 4096
    $region57: #{tpu_custom_call.1} parent=1 // pred_fallthru
      _
    %v99 = vld [vmem:[#allocation2] sm:$0xff]
    %v100 = vld [vmem:[#allocation5] sm:$0xff]
    %v101 = vld [vmem:[#allocation5 + $0x8] sm:$0xff]
    %v102 = vld [vmem:[#allocation5 + $0x10] sm:$0xff]
    %v103 = vld [vmem:[#allocation5 + $0x18] sm:$0xff]
    %v104 = vld [vmem:[#allocation5 + $0x20] sm:$0xff]
    %v105 = vld [vmem:[#allocation5 + $0x28] sm:$0xff]
    %v106 = vld [vmem:[#allocation5 + $0x30] sm:$0xff]
    %v107 = vld [vmem:[#allocation5 + $0x38] sm:$0xff]
    %v108 = vld [vmem:[#allocation5 + $0x40] sm:$0xff]
    %v109 = vld [vmem:[#allocation5 + $0x48] sm:$0xff]
    %v110 = vld [vmem:[#allocation5 + $0x50] sm:$0xff]
    %v111 = vld [vmem:[#allocation5 + $0x58] sm:$0xff]
    %v112 = vld [vmem:[#allocation5 + $0x60] sm:$0xff]
    %v113 = vld [vmem:[#allocation5 + $0x68] sm:$0xff]
    %v114 = vld [vmem:[#allocation5 + $0x70] sm:$0xff]
    %v115 = vld [vmem:[#allocation5 + $0x78] sm:$0xff]
    %v116 = vld [vmem:[%s2] sm:$0x1]
    %v118 = vlaneseq
    %v119 = vshrl.u32 %v118, 7
    %v120 = vsub.s32 0, %v119
    %v121 = vrot.slane %v116, %v120
    %123 = vmatprep.subr.mxu0 0.0
    %124 = vmatpush1.msra.mxu0 %v100
    %125 = vmatprep.subr.mxu0 0.0
    %126 = vmatpush1.msra.mxu0 %v101
    %127 = vmatprep.subr.mxu0 0.0
    %128 = vmatpush1.msra.mxu0 %v102
    %129 = vmatprep.subr.mxu0 0.0
    %130 = vmatpush1.msra.mxu0 %v103
    %131 = vmatprep.subr.mxu0 0.0
    %132 = vmatpush1.msra.mxu0 %v104
    %133 = vmatprep.subr.mxu0 0.0
    %134 = vmatpush1.msra.mxu0 %v105
    %135 = vmatprep.subr.mxu0 0.0
    %136 = vmatpush1.msra.mxu0 %v106
    %137 = vmatprep.subr.mxu0 0.0
    %138 = vmatpush1.msra.mxu0 %v107
    %139 = vmatprep.subr.mxu0 0.0
    %140 = vmatpush1.msra.mxu0 %v108
    %141 = vmatprep.subr.mxu0 0.0
    %142 = vmatpush1.msra.mxu0 %v109
    %143 = vmatprep.subr.mxu0 0.0
    %144 = vmatpush1.msra.mxu0 %v110
    %145 = vmatprep.subr.mxu0 0.0
    %146 = vmatpush1.msra.mxu0 %v111
    %147 = vmatprep.subr.mxu0 0.0
    %148 = vmatpush1.msra.mxu0 %v112
    %149 = vmatprep.subr.mxu0 0.0
    %150 = vmatpush1.msra.mxu0 %v113
    %151 = vmatprep.subr.mxu0 0.0
    %152 = vmatpush1.msra.mxu0 %v114
    %153 = vmatprep.subr.mxu0 0.0
    %154 = vmatpush1.msra.mxu0 %v115
    %155 = vmatprep.subr.mxu0 0.0
    %156 = vmatpush1.msra.mxu0 0.0
    %157 = vmatprep.subr.mxu0 0.0
    %158 = vmatpush1.msra.mxu0 0.0
    %159 = vmatprep.subr.mxu0 0.0
    %160 = vmatpush1.msra.mxu0 0.0
    %161 = vmatprep.subr.mxu0 0.0
    %162 = vmatpush1.msra.mxu0 0.0
    %163 = vmatprep.subr.mxu0 0.0
    %164 = vmatpush1.msra.mxu0 0.0
    %165 = vmatprep.subr.mxu0 0.0
    %166 = vmatpush1.msra.mxu0 0.0
    %167 = vmatprep.subr.mxu0 0.0
    %168 = vmatpush1.msra.mxu0 0.0
    %169 = vmatprep.subr.mxu0 0.0
    %170 = vmatpush1.msra.mxu0 0.0
    %171 = vmatprep.subr.mxu0 0.0
    %172 = vmatpush1.msra.mxu0 0.0
    %173 = vmatprep.subr.mxu0 0.0
    %174 = vmatpush1.msra.mxu0 0.0
    %175 = vmatprep.subr.mxu0 0.0
    %176 = vmatpush1.msra.mxu0 0.0
    %177 = vmatprep.subr.mxu0 0.0
    %178 = vmatpush1.msra.mxu0 0.0
    %179 = vmatprep.subr.mxu0 0.0
    %180 = vmatpush1.msra.mxu0 0.0
    %181 = vmatprep.subr.mxu0 0.0
    %182 = vmatpush1.msra.mxu0 0.0
    %183 = vmatprep.subr.mxu0 0.0
    %184 = vmatpush1.msra.mxu0 0.0
    %185 = vmatprep.subr.mxu0 0.0
    %186 = vmatpush1.msra.mxu0 0.0
    %187 = vmatprep.mubr.f32.mxu0 0.0
    %188 = vmatmul.mubr.f32.gmra.mrb[0].mxu0 %v99
    %v189 = vpop.f32.mrb[0].mxu0
    %v190 = vadd.f32 %v121, %v189
    %v191 = vpop.f32.mrb[0].mxu0
    %192 = vdwg.mxu0
    %v193 = vmax.f32 %v190, 0.0
    %v194 = vld [vmem:[#allocation7] sm:$0xff]
    %v195 = vld [vmem:[#allocation7 + $0x8] sm:$0xff]
    %v196 = vld [vmem:[#allocation7 + $0x10] sm:$0xff]
    %v197 = vld [vmem:[#allocation7 + $0x18] sm:$0xff]
    %v198 = vld [vmem:[#allocation7 + $0x20] sm:$0xff]
    %v199 = vld [vmem:[#allocation7 + $0x28] sm:$0xff]
    %v200 = vld [vmem:[#allocation7 + $0x30] sm:$0xff]
    %v201 = vld [vmem:[#allocation7 + $0x38] sm:$0xff]
    %v202 = vld [vmem:[#allocation7 + $0x40] sm:$0xff]
    %v203 = vld [vmem:[#allocation7 + $0x48] sm:$0xff]
    %v204 = vld [vmem:[#allocation7 + $0x50] sm:$0xff]
    %v205 = vld [vmem:[#allocation7 + $0x58] sm:$0xff]
    %v206 = vld [vmem:[#allocation7 + $0x60] sm:$0xff]
    %v207 = vld [vmem:[#allocation7 + $0x68] sm:$0xff]
    %v208 = vld [vmem:[#allocation7 + $0x70] sm:$0xff]
    %v209 = vld [vmem:[#allocation7 + $0x78] sm:$0xff]
    %v210 = vld [vmem:[#allocation7 + $0x80] sm:$0xff]
    %v211 = vld [vmem:[#allocation7 + $0x88] sm:$0xff]
    %v212 = vld [vmem:[#allocation7 + $0x90] sm:$0xff]
    %v213 = vld [vmem:[#allocation7 + $0x98] sm:$0xff]
    %v214 = vld [vmem:[#allocation7 + $0xa0] sm:$0xff]
    %v215 = vld [vmem:[#allocation7 + $0xa8] sm:$0xff]
    %v216 = vld [vmem:[#allocation7 + $0xb0] sm:$0xff]
    %v217 = vld [vmem:[#allocation7 + $0xb8] sm:$0xff]
    %v218 = vld [vmem:[#allocation7 + $0xc0] sm:$0xff]
    %v219 = vld [vmem:[#allocation7 + $0xc8] sm:$0xff]
    %v220 = vld [vmem:[#allocation7 + $0xd0] sm:$0xff]
    %v221 = vld [vmem:[#allocation7 + $0xd8] sm:$0xff]
    %v222 = vld [vmem:[#allocation7 + $0xe0] sm:$0xff]
    %v223 = vld [vmem:[#allocation7 + $0xe8] sm:$0xff]
    %v224 = vld [vmem:[#allocation7 + $0xf0] sm:$0xff]
    %v225 = vld [vmem:[#allocation7 + $0xf8] sm:$0xff]
    %v226 = vld [vmem:[#allocation7 + $0x100] sm:$0xff]
    %v227 = vld [vmem:[#allocation7 + $0x108] sm:$0xff]
    %v228 = vld [vmem:[#allocation7 + $0x110] sm:$0xff]
    %v229 = vld [vmem:[#allocation7 + $0x118] sm:$0xff]
    %v230 = vld [vmem:[#allocation7 + $0x120] sm:$0xff]
    %v231 = vld [vmem:[#allocation7 + $0x128] sm:$0xff]
    %v232 = vld [vmem:[#allocation7 + $0x130] sm:$0xff]
    %v233 = vld [vmem:[#allocation7 + $0x138] sm:$0xff]
    %v234 = vld [vmem:[#allocation7 + $0x140] sm:$0xff]
    %v235 = vld [vmem:[#allocation7 + $0x148] sm:$0xff]
    %v236 = vld [vmem:[#allocation7 + $0x150] sm:$0xff]
    %v237 = vld [vmem:[#allocation7 + $0x158] sm:$0xff]
    %v238 = vld [vmem:[#allocation7 + $0x160] sm:$0xff]
    %v239 = vld [vmem:[#allocation7 + $0x168] sm:$0xff]
    %v240 = vld [vmem:[#allocation7 + $0x170] sm:$0xff]
    %v241 = vld [vmem:[#allocation7 + $0x178] sm:$0xff]
    %v242 = vld [vmem:[%s4] sm:$0x7]
    %v244 = vlaneseq
    %v245 = vshrl.u32 %v244, 7
    %v246 = vsub.s32 0, %v245
    %v247 = vrot.slane %v242, %v246
    %v248 = vlaneseq
    %v249 = vshrl.u32 %v248, 7
    %v250 = vsub.s32 1, %v249
    %v251 = vrot.slane %v242, %v250
    %v252 = vlaneseq
    %v253 = vshrl.u32 %v252, 7
    %v254 = vsub.s32 2, %v253
    %v255 = vrot.slane %v242, %v254
    %259 = vmatprep.subr.mxu0 %v195
    %260 = vmatpush1.msra.mxu0 %v194
    %261 = vmatprep.subr.mxu0 %v198
    %262 = vmatpush1.msra.mxu0 %v197
    %263 = vmatprep.subr.mxu0 %v201
    %264 = vmatpush1.msra.mxu0 %v200
    %265 = vmatprep.subr.mxu0 %v204
    %266 = vmatpush1.msra.mxu0 %v203
    %267 = vmatprep.subr.mxu0 %v207
    %268 = vmatpush1.msra.mxu0 %v206
    %269 = vmatprep.subr.mxu0 %v210
    %270 = vmatpush1.msra.mxu0 %v209
    %271 = vmatprep.subr.mxu0 %v213
    %272 = vmatpush1.msra.mxu0 %v212
    %273 = vmatprep.subr.mxu0 %v216
    %274 = vmatpush1.msra.mxu0 %v215
    %275 = vmatprep.subr.mxu0 %v219
    %276 = vmatpush1.msra.mxu0 %v218
    %277 = vmatprep.subr.mxu0 %v222
    %278 = vmatpush1.msra.mxu0 %v221
    %279 = vmatprep.subr.mxu0 %v225
    %280 = vmatpush1.msra.mxu0 %v224
    %281 = vmatprep.subr.mxu0 %v228
    %282 = vmatpush1.msra.mxu0 %v227
    %283 = vmatprep.subr.mxu0 %v231
    %284 = vmatpush1.msra.mxu0 %v230
    %285 = vmatprep.subr.mxu0 %v234
    %286 = vmatpush1.msra.mxu0 %v233
    %287 = vmatprep.subr.mxu0 %v237
    %288 = vmatpush1.msra.mxu0 %v236
    %289 = vmatprep.subr.mxu0 %v240
    %290 = vmatpush1.msra.mxu0 %v239
    %291 = vmatprep.subr.mxu0 0.0
    %292 = vmatpush1.msra.mxu0 0.0
    %293 = vmatprep.subr.mxu0 0.0
    %294 = vmatpush1.msra.mxu0 0.0
    %295 = vmatprep.subr.mxu0 0.0
    %296 = vmatpush1.msra.mxu0 0.0
    %297 = vmatprep.subr.mxu0 0.0
    %298 = vmatpush1.msra.mxu0 0.0
    %299 = vmatprep.subr.mxu0 0.0
    %300 = vmatpush1.msra.mxu0 0.0
    %301 = vmatprep.subr.mxu0 0.0
    %302 = vmatpush1.msra.mxu0 0.0
    %303 = vmatprep.subr.mxu0 0.0
    %304 = vmatpush1.msra.mxu0 0.0
    %305 = vmatprep.subr.mxu0 0.0
    %306 = vmatpush1.msra.mxu0 0.0
    %307 = vmatprep.subr.mxu0 0.0
    %308 = vmatpush1.msra.mxu0 0.0
    %309 = vmatprep.subr.mxu0 0.0
    %310 = vmatpush1.msra.mxu0 0.0
    %311 = vmatprep.subr.mxu0 0.0
    %312 = vmatpush1.msra.mxu0 0.0
    %313 = vmatprep.subr.mxu0 0.0
    %314 = vmatpush1.msra.mxu0 0.0
    %315 = vmatprep.subr.mxu0 0.0
    %316 = vmatpush1.msra.mxu0 0.0
    %317 = vmatprep.subr.mxu0 0.0
    %318 = vmatpush1.msra.mxu0 0.0
    %319 = vmatprep.subr.mxu0 0.0
    %320 = vmatpush1.msra.mxu0 0.0
    %321 = vmatprep.subr.mxu0 0.0
    %322 = vmatpush1.msra.mxu0 0.0
    %323 = vmatprep.mubr.f32.mxu0 0.0
    %324 = vmatmul.mubr.f32.gmra.mrb[0].mxu0 %v193
    %v325 = vpop.f32.mrb[0].mxu0
    %v326 = vadd.f32 %v247, %v325
    %v327 = vpop.f32.mrb[0].mxu0
    %v328 = vadd.f32 %v251, %v327
    %329 = vdwg.mxu0
    %330 = vmatprep.subr.mxu0 0.0
    %331 = vmatpush1.msra.mxu0 %v196
    %332 = vmatprep.subr.mxu0 0.0
    %333 = vmatpush1.msra.mxu0 %v199
    %334 = vmatprep.subr.mxu0 0.0
    %335 = vmatpush1.msra.mxu0 %v202
    %336 = vmatprep.subr.mxu0 0.0
    %337 = vmatpush1.msra.mxu0 %v205
    %338 = vmatprep.subr.mxu0 0.0
    %339 = vmatpush1.msra.mxu0 %v208
    %340 = vmatprep.subr.mxu0 0.0
    %341 = vmatpush1.msra.mxu0 %v211
    %342 = vmatprep.subr.mxu0 0.0
    %343 = vmatpush1.msra.mxu0 %v214
    %344 = vmatprep.subr.mxu0 0.0
    %345 = vmatpush1.msra.mxu0 %v217
    %346 = vmatprep.subr.mxu0 0.0
    %347 = vmatpush1.msra.mxu0 %v220
    %348 = vmatprep.subr.mxu0 0.0
    %349 = vmatpush1.msra.mxu0 %v223
    %350 = vmatprep.subr.mxu0 0.0
    %351 = vmatpush1.msra.mxu0 %v226
    %352 = vmatprep.subr.mxu0 0.0
    %353 = vmatpush1.msra.mxu0 %v229
    %354 = vmatprep.subr.mxu0 0.0
    %355 = vmatpush1.msra.mxu0 %v232
    %356 = vmatprep.subr.mxu0 0.0
    %357 = vmatpush1.msra.mxu0 %v235
    %358 = vmatprep.subr.mxu0 0.0
    %359 = vmatpush1.msra.mxu0 %v238
    %360 = vmatprep.subr.mxu0 0.0
    %361 = vmatpush1.msra.mxu0 %v241
    %362 = vmatprep.subr.mxu0 0.0
    %363 = vmatpush1.msra.mxu0 0.0
    %364 = vmatprep.subr.mxu0 0.0
    %365 = vmatpush1.msra.mxu0 0.0
    %366 = vmatprep.subr.mxu0 0.0
    %367 = vmatpush1.msra.mxu0 0.0
    %368 = vmatprep.subr.mxu0 0.0
    %369 = vmatpush1.msra.mxu0 0.0
    %370 = vmatprep.subr.mxu0 0.0
    %371 = vmatpush1.msra.mxu0 0.0
    %372 = vmatprep.subr.mxu0 0.0
    %373 = vmatpush1.msra.mxu0 0.0
    %374 = vmatprep.subr.mxu0 0.0
    %375 = vmatpush1.msra.mxu0 0.0
    %376 = vmatprep.subr.mxu0 0.0
    %377 = vmatpush1.msra.mxu0 0.0
    %378 = vmatprep.subr.mxu0 0.0
    %379 = vmatpush1.msra.mxu0 0.0
    %380 = vmatprep.subr.mxu0 0.0
    %381 = vmatpush1.msra.mxu0 0.0
    %382 = vmatprep.subr.mxu0 0.0
    %383 = vmatpush1.msra.mxu0 0.0
    %384 = vmatprep.subr.mxu0 0.0
    %385 = vmatpush1.msra.mxu0 0.0
    %386 = vmatprep.subr.mxu0 0.0
    %387 = vmatpush1.msra.mxu0 0.0
    %388 = vmatprep.subr.mxu0 0.0
    %389 = vmatpush1.msra.mxu0 0.0
    %390 = vmatprep.subr.mxu0 0.0
    %391 = vmatpush1.msra.mxu0 0.0
    %392 = vmatprep.subr.mxu0 0.0
    %393 = vmatpush1.msra.mxu0 0.0
    %394 = vmatprep.mubr.f32.mxu0 0.0
    %395 = vmatmul.mubr.f32.gmra.mrb[0].mxu0 %v193
    %v396 = vpop.f32.mrb[0].mxu0
    %v397 = vadd.f32 %v255, %v396
    %v398 = vpop.f32.mrb[0].mxu0
    %399 = vdwg.mxu0
    %v400 = vmax.f32 %v326, 0.0
    %v401 = vmax.f32 %v328, 0.0
    %v402 = vmax.f32 %v397, 0.0
    %v403 = vld [vmem:[#allocation8] sm:$0xff]
    %v404 = vld [vmem:[#allocation8 + $0x8] sm:$0xff]
    %v405 = vld [vmem:[#allocation8 + $0x10] sm:$0xff]
    %v406 = vld [vmem:[#allocation8 + $0x18] sm:$0xff]
    %v407 = vld [vmem:[#allocation8 + $0x20] sm:$0xff]
    %v408 = vld [vmem:[#allocation8 + $0x28] sm:$0xff]
    %v409 = vld [vmem:[#allocation8 + $0x30] sm:$0xff]
    %v410 = vld [vmem:[#allocation8 + $0x38] sm:$0xff]
    %v411 = vld [vmem:[#allocation8 + $0x40] sm:$0xff]
    %v412 = vld [vmem:[#allocation8 + $0x48] sm:$0xff]
    %v413 = vld [vmem:[#allocation8 + $0x50] sm:$0xff]
    %v414 = vld [vmem:[#allocation8 + $0x58] sm:$0xff]
    %v415 = vld [vmem:[#allocation8 + $0x60] sm:$0xff]
    %v416 = vld [vmem:[#allocation8 + $0x68] sm:$0xff]
    %v417 = vld [vmem:[#allocation8 + $0x70] sm:$0xff]
    %v418 = vld [vmem:[#allocation8 + $0x78] sm:$0xff]
    %v419 = vld [vmem:[#allocation8 + $0x80] sm:$0xff]
    %v420 = vld [vmem:[#allocation8 + $0x88] sm:$0xff]
    %v421 = vld [vmem:[#allocation8 + $0x90] sm:$0xff]
    %v422 = vld [vmem:[#allocation8 + $0x98] sm:$0xff]
    %v423 = vld [vmem:[#allocation8 + $0xa0] sm:$0xff]
    %v424 = vld [vmem:[#allocation8 + $0xa8] sm:$0xff]
    %v425 = vld [vmem:[#allocation8 + $0xb0] sm:$0xff]
    %v426 = vld [vmem:[#allocation8 + $0xb8] sm:$0xff]
    %v427 = vld [vmem:[#allocation8 + $0xc0] sm:$0xff]
    %v428 = vld [vmem:[#allocation8 + $0xc8] sm:$0xff]
    %v429 = vld [vmem:[#allocation8 + $0xd0] sm:$0xff]
    %v430 = vld [vmem:[#allocation8 + $0xd8] sm:$0xff]
    %v431 = vld [vmem:[#allocation8 + $0xe0] sm:$0xff]
    %v432 = vld [vmem:[#allocation8 + $0xe8] sm:$0xff]
    %v433 = vld [vmem:[#allocation8 + $0xf0] sm:$0xff]
    %v434 = vld [vmem:[#allocation8 + $0xf8] sm:$0xff]
    %v435 = vld [vmem:[#allocation8 + $0x100] sm:$0xff]
    %v436 = vld [vmem:[#allocation8 + $0x108] sm:$0xff]
    %v437 = vld [vmem:[#allocation8 + $0x110] sm:$0xff]
    %v438 = vld [vmem:[#allocation8 + $0x118] sm:$0xff]
    %v439 = vld [vmem:[#allocation8 + $0x120] sm:$0xff]
    %v440 = vld [vmem:[#allocation8 + $0x128] sm:$0xff]
    %v441 = vld [vmem:[#allocation8 + $0x130] sm:$0xff]
    %v442 = vld [vmem:[#allocation8 + $0x138] sm:$0xff]
    %v443 = vld [vmem:[#allocation8 + $0x140] sm:$0xff]
    %v444 = vld [vmem:[#allocation8 + $0x148] sm:$0xff]
    %v445 = vld [vmem:[#allocation8 + $0x150] sm:$0xff]
    %v446 = vld [vmem:[#allocation8 + $0x158] sm:$0xff]
    %v447 = vld [vmem:[#allocation8 + $0x160] sm:$0xff]
    %v448 = vld [vmem:[#allocation8 + $0x168] sm:$0xff]
    %v449 = vld [vmem:[#allocation8 + $0x170] sm:$0xff]
    %v450 = vld [vmem:[#allocation8 + $0x178] sm:$0xff]
    %v451 = vld [vmem:[#allocation8 + $0x180] sm:$0xff]
    %v452 = vld [vmem:[#allocation8 + $0x188] sm:$0xff]
    %v453 = vld [vmem:[#allocation8 + $0x190] sm:$0xff]
    %v454 = vld [vmem:[#allocation8 + $0x198] sm:$0xff]
    %v455 = vld [vmem:[#allocation8 + $0x1a0] sm:$0xff]
    %v456 = vld [vmem:[#allocation8 + $0x1a8] sm:$0xff]
    %v457 = vld [vmem:[#allocation8 + $0x1b0] sm:$0xff]
    %v458 = vld [vmem:[#allocation8 + $0x1b8] sm:$0xff]
    %v459 = vld [vmem:[#allocation8 + $0x1c0] sm:$0xff]
    %v460 = vld [vmem:[#allocation8 + $0x1c8] sm:$0xff]
    %v461 = vld [vmem:[#allocation8 + $0x1d0] sm:$0xff]
    %v462 = vld [vmem:[#allocation8 + $0x1d8] sm:$0xff]
    %v463 = vld [vmem:[#allocation8 + $0x1e0] sm:$0xff]
    %v464 = vld [vmem:[#allocation8 + $0x1e8] sm:$0xff]
    %v465 = vld [vmem:[#allocation8 + $0x1f0] sm:$0xff]
    %v466 = vld [vmem:[#allocation8 + $0x1f8] sm:$0xff]
    %v467 = vld [vmem:[#allocation8 + $0x200] sm:$0xff]
    %v468 = vld [vmem:[#allocation8 + $0x208] sm:$0xff]
    %v469 = vld [vmem:[#allocation8 + $0x210] sm:$0xff]
    %v470 = vld [vmem:[#allocation8 + $0x218] sm:$0xff]
    %v471 = vld [vmem:[#allocation8 + $0x220] sm:$0xff]
    %v472 = vld [vmem:[#allocation8 + $0x228] sm:$0xff]
    %v473 = vld [vmem:[#allocation8 + $0x230] sm:$0xff]
    %v474 = vld [vmem:[#allocation8 + $0x238] sm:$0xff]
    %v475 = vld [vmem:[#allocation8 + $0x240] sm:$0xff]
    %v476 = vld [vmem:[#allocation8 + $0x248] sm:$0xff]
    %v477 = vld [vmem:[#allocation8 + $0x250] sm:$0xff]
    %v478 = vld [vmem:[#allocation8 + $0x258] sm:$0xff]
    %v479 = vld [vmem:[#allocation8 + $0x260] sm:$0xff]
    %v480 = vld [vmem:[#allocation8 + $0x268] sm:$0xff]
    %v481 = vld [vmem:[#allocation8 + $0x270] sm:$0xff]
    %v482 = vld [vmem:[#allocation8 + $0x278] sm:$0xff]
    %v483 = vld [vmem:[#allocation8 + $0x280] sm:$0xff]
    %v484 = vld [vmem:[#allocation8 + $0x288] sm:$0xff]
    %v485 = vld [vmem:[#allocation8 + $0x290] sm:$0xff]
    %v486 = vld [vmem:[#allocation8 + $0x298] sm:$0xff]
    %v487 = vld [vmem:[#allocation8 + $0x2a0] sm:$0xff]
    %v488 = vld [vmem:[#allocation8 + $0x2a8] sm:$0xff]
    %v489 = vld [vmem:[#allocation8 + $0x2b0] sm:$0xff]
    %v490 = vld [vmem:[#allocation8 + $0x2b8] sm:$0xff]
    %v491 = vld [vmem:[#allocation8 + $0x2c0] sm:$0xff]
    %v492 = vld [vmem:[#allocation8 + $0x2c8] sm:$0xff]
    %v493 = vld [vmem:[#allocation8 + $0x2d0] sm:$0xff]
    %v494 = vld [vmem:[#allocation8 + $0x2d8] sm:$0xff]
    %v495 = vld [vmem:[#allocation8 + $0x2e0] sm:$0xff]
    %v496 = vld [vmem:[#allocation8 + $0x2e8] sm:$0xff]
    %v497 = vld [vmem:[#allocation8 + $0x2f0] sm:$0xff]
    %v498 = vld [vmem:[#allocation8 + $0x2f8] sm:$0xff]
    %v499 = vld [vmem:[%s6] sm:$0x3]
    %v501 = vlaneseq
    %v502 = vshrl.u32 %v501, 7
    %v503 = vsub.s32 0, %v502
    %v504 = vrot.slane %v499, %v503
    %v505 = vlaneseq
    %v506 = vshrl.u32 %v505, 7
    %v507 = vsub.s32 1, %v506
    %v508 = vrot.slane %v499, %v507
    %511 = vmatprep.subr.mxu0 %v404
    %512 = vmatpush1.msra.mxu0 %v403
    %513 = vmatprep.subr.mxu0 %v406
    %514 = vmatpush1.msra.mxu0 %v405
    %515 = vmatprep.subr.mxu0 %v408
    %516 = vmatpush1.msra.mxu0 %v407
    %517 = vmatprep.subr.mxu0 %v410
    %518 = vmatpush1.msra.mxu0 %v409
    %519 = vmatprep.subr.mxu0 %v412
    %520 = vmatpush1.msra.mxu0 %v411
    %521 = vmatprep.subr.mxu0 %v414
    %522 = vmatpush1.msra.mxu0 %v413
    %523 = vmatprep.subr.mxu0 %v416
    %524 = vmatpush1.msra.mxu0 %v415
    %525 = vmatprep.subr.mxu0 %v418
    %526 = vmatpush1.msra.mxu0 %v417
    %527 = vmatprep.subr.mxu0 %v420
    %528 = vmatpush1.msra.mxu0 %v419
    %529 = vmatprep.subr.mxu0 %v422
    %530 = vmatpush1.msra.mxu0 %v421
    %531 = vmatprep.subr.mxu0 %v424
    %532 = vmatpush1.msra.mxu0 %v423
    %533 = vmatprep.subr.mxu0 %v426
    %534 = vmatpush1.msra.mxu0 %v425
    %535 = vmatprep.subr.mxu0 %v428
    %536 = vmatpush1.msra.mxu0 %v427
    %537 = vmatprep.subr.mxu0 %v430
    %538 = vmatpush1.msra.mxu0 %v429
    %539 = vmatprep.subr.mxu0 %v432
    %540 = vmatpush1.msra.mxu0 %v431
    %541 = vmatprep.subr.mxu0 %v434
    %542 = vmatpush1.msra.mxu0 %v433
    %543 = vmatprep.subr.mxu0 %v436
    %544 = vmatpush1.msra.mxu0 %v435
    %545 = vmatprep.subr.mxu0 %v438
    %546 = vmatpush1.msra.mxu0 %v437
    %547 = vmatprep.subr.mxu0 %v440
    %548 = vmatpush1.msra.mxu0 %v439
    %549 = vmatprep.subr.mxu0 %v442
    %550 = vmatpush1.msra.mxu0 %v441
    %551 = vmatprep.subr.mxu0 %v444
    %552 = vmatpush1.msra.mxu0 %v443
    %553 = vmatprep.subr.mxu0 %v446
    %554 = vmatpush1.msra.mxu0 %v445
    %555 = vmatprep.subr.mxu0 %v448
    %556 = vmatpush1.msra.mxu0 %v447
    %557 = vmatprep.subr.mxu0 %v450
    %558 = vmatpush1.msra.mxu0 %v449
    %559 = vmatprep.subr.mxu0 %v452
    %560 = vmatpush1.msra.mxu0 %v451
    %561 = vmatprep.subr.mxu0 %v454
    %562 = vmatpush1.msra.mxu0 %v453
    %563 = vmatprep.subr.mxu0 %v456
    %564 = vmatpush1.msra.mxu0 %v455
    %565 = vmatprep.subr.mxu0 %v458
    %566 = vmatpush1.msra.mxu0 %v457
    %567 = vmatprep.subr.mxu0 %v460
    %568 = vmatpush1.msra.mxu0 %v459
    %569 = vmatprep.subr.mxu0 %v462
    %570 = vmatpush1.msra.mxu0 %v461
    %571 = vmatprep.subr.mxu0 %v464
    %572 = vmatpush1.msra.mxu0 %v463
    %573 = vmatprep.subr.mxu0 %v466
    %574 = vmatpush1.msra.mxu0 %v465
    %575 = vmatprep.mubr.f32.mxu0 %v401
    %576 = vmatmul.mubr.f32.gmra.mrb[0].mxu0 %v400
    %v577 = vpop.f32.mrb[0].mxu0
    %v578 = vadd.f32 %v504, %v577
    %v579 = vpop.f32.mrb[0].mxu0
    %v580 = vadd.f32 %v508, %v579
    %581 = vdwg.mxu0
    %582 = vmatprep.subr.mxu0 %v468
    %583 = vmatpush1.msra.mxu0 %v467
    %584 = vmatprep.subr.mxu0 %v470
    %585 = vmatpush1.msra.mxu0 %v469
    %586 = vmatprep.subr.mxu0 %v472
    %587 = vmatpush1.msra.mxu0 %v471
    %588 = vmatprep.subr.mxu0 %v474
    %589 = vmatpush1.msra.mxu0 %v473
    %590 = vmatprep.subr.mxu0 %v476
    %591 = vmatpush1.msra.mxu0 %v475
    %592 = vmatprep.subr.mxu0 %v478
    %593 = vmatpush1.msra.mxu0 %v477
    %594 = vmatprep.subr.mxu0 %v480
    %595 = vmatpush1.msra.mxu0 %v479
    %596 = vmatprep.subr.mxu0 %v482
    %597 = vmatpush1.msra.mxu0 %v481
    %598 = vmatprep.subr.mxu0 %v484
    %599 = vmatpush1.msra.mxu0 %v483
    %600 = vmatprep.subr.mxu0 %v486
    %601 = vmatpush1.msra.mxu0 %v485
    %602 = vmatprep.subr.mxu0 %v488
    %603 = vmatpush1.msra.mxu0 %v487
    %604 = vmatprep.subr.mxu0 %v490
    %605 = vmatpush1.msra.mxu0 %v489
    %606 = vmatprep.subr.mxu0 %v492
    %607 = vmatpush1.msra.mxu0 %v491
    %608 = vmatprep.subr.mxu0 %v494
    %609 = vmatpush1.msra.mxu0 %v493
    %610 = vmatprep.subr.mxu0 %v496
    %611 = vmatpush1.msra.mxu0 %v495
    %612 = vmatprep.subr.mxu0 %v498
    %613 = vmatpush1.msra.mxu0 %v497
    %614 = vmatprep.subr.mxu0 0.0
    %615 = vmatpush1.msra.mxu0 0.0
    %616 = vmatprep.subr.mxu0 0.0
    %617 = vmatpush1.msra.mxu0 0.0
    %618 = vmatprep.subr.mxu0 0.0
    %619 = vmatpush1.msra.mxu0 0.0
    %620 = vmatprep.subr.mxu0 0.0
    %621 = vmatpush1.msra.mxu0 0.0
    %622 = vmatprep.subr.mxu0 0.0
    %623 = vmatpush1.msra.mxu0 0.0
    %624 = vmatprep.subr.mxu0 0.0
    %625 = vmatpush1.msra.mxu0 0.0
    %626 = vmatprep.subr.mxu0 0.0
    %627 = vmatpush1.msra.mxu0 0.0
    %628 = vmatprep.subr.mxu0 0.0
    %629 = vmatpush1.msra.mxu0 0.0
    %630 = vmatprep.subr.mxu0 0.0
    %631 = vmatpush1.msra.mxu0 0.0
    %632 = vmatprep.subr.mxu0 0.0
    %633 = vmatpush1.msra.mxu0 0.0
    %634 = vmatprep.subr.mxu0 0.0
    %635 = vmatpush1.msra.mxu0 0.0
    %636 = vmatprep.subr.mxu0 0.0
    %637 = vmatpush1.msra.mxu0 0.0
    %638 = vmatprep.subr.mxu0 0.0
    %639 = vmatpush1.msra.mxu0 0.0
    %640 = vmatprep.subr.mxu0 0.0
    %641 = vmatpush1.msra.mxu0 0.0
    %642 = vmatprep.subr.mxu0 0.0
    %643 = vmatpush1.msra.mxu0 0.0
    %644 = vmatprep.subr.mxu0 0.0
    %645 = vmatpush1.msra.mxu0 0.0
    %646 = vmatprep.mubr.f32.mxu0 0.0
    %647 = vmatmul.mubr.f32.gmra.mrb[0].mxu0 %v402
    %v648 = vpop.f32.mrb[0].mxu0
    %v649 = vadd.f32 %v578, %v648
    %v650 = vpop.f32.mrb[0].mxu0
    %v651 = vadd.f32 %v580, %v650
    %652 = vdwg.mxu0
    %v653 = vmax.f32 %v649, 0.0
    %v654 = vmax.f32 %v651, 0.0
    %v655 = vld [vmem:[#allocation10] sm:$0xff]
    %v656 = vld [vmem:[#allocation10 + $0x8] sm:$0xff]
    %v657 = vld [vmem:[#allocation10 + $0x10] sm:$0xff]
    %v658 = vld [vmem:[#allocation10 + $0x18] sm:$0xff]
    %v659 = vld [vmem:[#allocation10 + $0x20] sm:$0xff]
    %v660 = vld [vmem:[#allocation10 + $0x28] sm:$0xff]
    %v661 = vld [vmem:[#allocation10 + $0x30] sm:$0xff]
    %v662 = vld [vmem:[#allocation10 + $0x38] sm:$0xff]
    %v663 = vld [vmem:[#allocation10 + $0x40] sm:$0xff]
    %v664 = vld [vmem:[#allocation10 + $0x48] sm:$0xff]
    %v665 = vld [vmem:[#allocation10 + $0x50] sm:$0xff]
    %v666 = vld [vmem:[#allocation10 + $0x58] sm:$0xff]
    %v667 = vld [vmem:[#allocation10 + $0x60] sm:$0xff]
    %v668 = vld [vmem:[#allocation10 + $0x68] sm:$0xff]
    %v669 = vld [vmem:[#allocation10 + $0x70] sm:$0xff]
    %v670 = vld [vmem:[#allocation10 + $0x78] sm:$0xff]
    %v671 = vld [vmem:[#allocation10 + $0x80] sm:$0xff]
    %v672 = vld [vmem:[#allocation10 + $0x88] sm:$0xff]
    %v673 = vld [vmem:[#allocation10 + $0x90] sm:$0xff]
    %v674 = vld [vmem:[#allocation10 + $0x98] sm:$0xff]
    %v675 = vld [vmem:[#allocation10 + $0xa0] sm:$0xff]
    %v676 = vld [vmem:[#allocation10 + $0xa8] sm:$0xff]
    %v677 = vld [vmem:[#allocation10 + $0xb0] sm:$0xff]
    %v678 = vld [vmem:[#allocation10 + $0xb8] sm:$0xff]
    %v679 = vld [vmem:[#allocation10 + $0xc0] sm:$0xff]
    %v680 = vld [vmem:[#allocation10 + $0xc8] sm:$0xff]
    %v681 = vld [vmem:[#allocation10 + $0xd0] sm:$0xff]
    %v682 = vld [vmem:[#allocation10 + $0xd8] sm:$0xff]
    %v683 = vld [vmem:[#allocation10 + $0xe0] sm:$0xff]
    %v684 = vld [vmem:[#allocation10 + $0xe8] sm:$0xff]
    %v685 = vld [vmem:[#allocation10 + $0xf0] sm:$0xff]
    %v686 = vld [vmem:[#allocation10 + $0xf8] sm:$0xff]
    %v687 = vld [vmem:[%s8] sm:$0x1]
    %v689 = vlaneseq
    %v690 = vshrl.u32 %v689, 7
    %v691 = vsub.s32 0, %v690
    %v692 = vrot.slane %v687, %v691
    %694 = vmatprep.subr.mxu0 0.0
    %695 = vmatpush1.msra.mxu0 %v655
    %696 = vmatprep.subr.mxu0 0.0
    %697 = vmatpush1.msra.mxu0 %v656
    %698 = vmatprep.subr.mxu0 0.0
    %699 = vmatpush1.msra.mxu0 %v657
    %700 = vmatprep.subr.mxu0 0.0
    %701 = vmatpush1.msra.mxu0 %v658
    %702 = vmatprep.subr.mxu0 0.0
    %703 = vmatpush1.msra.mxu0 %v659
    %704 = vmatprep.subr.mxu0 0.0
    %705 = vmatpush1.msra.mxu0 %v660
    %706 = vmatprep.subr.mxu0 0.0
    %707 = vmatpush1.msra.mxu0 %v661
    %708 = vmatprep.subr.mxu0 0.0
    %709 = vmatpush1.msra.mxu0 %v662
    %710 = vmatprep.subr.mxu0 0.0
    %711 = vmatpush1.msra.mxu0 %v663
    %712 = vmatprep.subr.mxu0 0.0
    %713 = vmatpush1.msra.mxu0 %v664
    %714 = vmatprep.subr.mxu0 0.0
    %715 = vmatpush1.msra.mxu0 %v665
    %716 = vmatprep.subr.mxu0 0.0
    %717 = vmatpush1.msra.mxu0 %v666
    %718 = vmatprep.subr.mxu0 0.0
    %719 = vmatpush1.msra.mxu0 %v667
    %720 = vmatprep.subr.mxu0 0.0
    %721 = vmatpush1.msra.mxu0 %v668
    %722 = vmatprep.subr.mxu0 0.0
    %723 = vmatpush1.msra.mxu0 %v669
    %724 = vmatprep.subr.mxu0 0.0
    %725 = vmatpush1.msra.mxu0 %v670
    %726 = vmatprep.subr.mxu0 0.0
    %727 = vmatpush1.msra.mxu0 %v671
    %728 = vmatprep.subr.mxu0 0.0
    %729 = vmatpush1.msra.mxu0 %v672
    %730 = vmatprep.subr.mxu0 0.0
    %731 = vmatpush1.msra.mxu0 %v673
    %732 = vmatprep.subr.mxu0 0.0
    %733 = vmatpush1.msra.mxu0 %v674
    %734 = vmatprep.subr.mxu0 0.0
    %735 = vmatpush1.msra.mxu0 %v675
    %736 = vmatprep.subr.mxu0 0.0
    %737 = vmatpush1.msra.mxu0 %v676
    %738 = vmatprep.subr.mxu0 0.0
    %739 = vmatpush1.msra.mxu0 %v677
    %740 = vmatprep.subr.mxu0 0.0
    %741 = vmatpush1.msra.mxu0 %v678
    %742 = vmatprep.subr.mxu0 0.0
    %743 = vmatpush1.msra.mxu0 %v679
    %744 = vmatprep.subr.mxu0 0.0
    %745 = vmatpush1.msra.mxu0 %v680
    %746 = vmatprep.subr.mxu0 0.0
    %747 = vmatpush1.msra.mxu0 %v681
    %748 = vmatprep.subr.mxu0 0.0
    %749 = vmatpush1.msra.mxu0 %v682
    %750 = vmatprep.subr.mxu0 0.0
    %751 = vmatpush1.msra.mxu0 %v683
    %752 = vmatprep.subr.mxu0 0.0
    %753 = vmatpush1.msra.mxu0 %v684
    %754 = vmatprep.subr.mxu0 0.0
    %755 = vmatpush1.msra.mxu0 %v685
    %756 = vmatprep.subr.mxu0 0.0
    %757 = vmatpush1.msra.mxu0 %v686
    %758 = vmatprep.mubr.f32.mxu0 %v654
    %759 = vmatmul.mubr.f32.gmra.mrb[0].mxu0 %v653
    %v760 = vpop.f32.mrb[0].mxu0
    %v761 = vadd.f32 %v692, %v760
    %v762 = vpop.f32.mrb[0].mxu0
    %763 = vdwg.mxu0
    %v764 = vxor.u32 %v761, 2147483648
    %v765 = vmul.f32 %v764, 1.442695
    %v766 = vpow.pop %v765
    %v767 = vadd.f32 %v766, 1.0
    %v768 = vrcp.pop %v767
    %v769 = vmul.f32 1.0, %v768
    %770 = vst [vmem:[#allocation11] sm:$0xff] %v769
    // Predicated region
    $region58: #{tpu_custom_call.1} parent=1 // pred_check
      _
    $region59: #{tpu_custom_call.1} parent=1 // pred_check_branch
      %772 = sbr.rel (0) target = $region61
    $region60: #{tpu_custom_call.1} parent=1 // pred_region
      %s774 = ssub.s32 128, 128
      %775 = vsyncadd [#allocation4], %s774
      %s777 = sshll.u32 [#allocation11], 4
      %s778 = int_to_ptr.vmem [resolvable:$true] %s777
      %780 = dma.vmem_to_hbm [thread:$0]  %s778, 128, %s9, [#allocation4]
    $region61: #{tpu_custom_call.1} parent=1 // pred_fallthru
      _
    // Predicated region
    $region62: #{tpu_custom_call.1} parent=1 // pred_check
      _
    $region63: #{tpu_custom_call.1} parent=1 // pred_check_branch
      %782 = sbr.rel (0) target = $region65
    $region64: #{tpu_custom_call.1} parent=1 // pred_region
      %783 = dma.done [#allocation4], 128
    $region65: #{tpu_custom_call.1} parent=1 // pred_fallthru
      _
    %784 = vsyncpa [#allocation3], 1
    %785 = vsyncpa [#allocation6], 1
    %786 = vsyncpa [#allocation9], 1
    %787 = vsyncpa [#allocation4], 1

</llo_original>
